<compile_context>
chip_gen: v7x
topology: tpu7x:2x2x1
jax: 0.10.0
libtpu: 0.0.40
codegen_flags: <defaults>
</compile_context>

<pallas_src>
import functools

import jax
import jax.numpy as jnp
from jax.experimental import pallas as pl
from jax.experimental.pallas import tpu as pltpu


def frelu_kernel(params_ref, x_ref, o_ref, *, H, W, TC):
    # x_ref / o_ref: (TC, S_pad) lane-dense flattened spatial block.
    # params_ref:    (C_pad, 16) resident table; [:, 0:9] = BN-scale-folded 3x3
    #                taps, [:, 9] = folded BN bias (eval-mode running stats).
    xf = x_ref[...].astype(jnp.float32)
    S = xf.shape[1]                       # padded H*W (multiple of 128)

    # Slice this block's channel rows out of the resident param table.
    c0 = pl.multiple_of(pl.program_id(1) * TC, 8)
    p = params_ref[pl.ds(c0, TC), :].astype(jnp.float32)   # (TC, 16)
    w = p[:, 0:9]                                          # (TC, 9)
    bias = p[:, 9:10]                                      # (TC, 1)

    lane = jax.lax.broadcasted_iota(jnp.int32, (1, S), 1)
    col = lane % W
    # Column validity via pre-zeroed sources (2 selects total instead of 8):
    #   taps reading col-1 (j=0) use the copy whose last column is zeroed,
    #   taps reading col+1 (j=2) use the copy whose first column is zeroed.
    x_zero_last = jnp.where(col == W - 1, 0.0, xf)
    x_zero_first = jnp.where(col == 0, 0.0, xf)
    srcs = (x_zero_last, xf, x_zero_first)

    def row_taps(i):
        # 3-tap partial sum for row offset (i-1); t[s] = src[s + k] via XLU roll
        # (wrap-around lanes are zero in the pre-zeroed source or covered by the
        # row mask applied to the whole partial below).
        part = None
        for j in range(3):
            k = (i - 1) * W + (j - 1)
            src = srcs[j]
            t = src if k == 0 else pltpu.roll(src, shift=(-k) % S, axis=1)
            term = w[:, i * 3 + j: i * 3 + j + 1] * t      # (TC,1) lane-broadcast
            part = term if part is None else part + term
        return part

    # Middle row is always row-valid; top/bottom rows get one mask per partial.
    acc = row_taps(1) + bias
    acc = acc + jnp.where(lane >= W, row_taps(0), 0.0)
    acc = acc + jnp.where(lane < (H - 1) * W, row_taps(2), 0.0)

    o_ref[...] = jnp.maximum(xf, acc).astype(o_ref.dtype)


def _round_up(x, m):
    return (x + m - 1) // m * m


def _pick_tc(N, C_r, S_pad):
    """Channel tile (multiple of 8, divides C_r) under a generation-aware
    VMEM budget; also returns the vmem_limit_bytes to request."""
    try:
        info = pltpu.get_tpu_info()
        vmem_bytes = int(getattr(info, "vmem_capacity_bytes",
                                 64 * 1024 * 1024))
    except Exception:
        vmem_bytes = 64 * 1024 * 1024
    big_vmem = vmem_bytes >= 100 * 1024 * 1024       # v5e/v6e: 128 MiB; v7x: 64 MiB
    max_elems = (2 * 1024 * 1024) if big_vmem else (512 * 1024)

    max_tc = max(8, (max_elems // S_pad) // 8 * 8)
    cand = [d for d in range(8, C_r + 1, 8) if C_r % d == 0 and d <= max_tc]
    if not cand:
        cand = [8]
    tc = cand[-1]
    # v7x megacore: prefer >=2 grid steps so both TensorCores get work.
    while N * (C_r // tc) < 2 and tc > 8:
        smaller = [d for d in cand if d < tc]
        if not smaller:
            break
        tc = smaller[-1]

    vmem_limit = (100 if big_vmem else 44) * 1024 * 1024
    return tc, vmem_limit


def frelu(x, w, scale, bias):
    N, C, H, W = x.shape
    S = H * W
    S_pad = _round_up(S, 128)             # lane-dense: unmasked full-lane stores
    C_r = _round_up(C, 8)
    itemsize = x.dtype.itemsize

    TC, vmem_limit = _pick_tc(N, C_r, S_pad)
    C_pad = _round_up(C_r, TC)
    grid = (N, C_pad // TC)

    # Flatten spatial and zero-pad the channel / lane tails.  Pad lanes only
    # feed already-masked or discarded outputs.
    x2 = x.reshape(N, C, S)
    if S_pad != S or C_pad != C:
        x2 = jnp.pad(x2, ((0, 0), (0, C_pad - C), (0, S_pad - S)))

    # Fold the (eval-mode) BN scale into the depthwise taps; pack taps + bias
    # into one resident param table (fetched once for the whole grid).
    w_folded = (w.astype(jnp.float32) *
                scale.astype(jnp.float32)[:, None, None]).reshape(C, 9)
    params = jnp.zeros((C_pad, 16), jnp.float32)
    params = params.at[:C, 0:9].set(w_folded)
    params = params.at[:C, 9].set(bias.astype(jnp.float32))

    kernel = functools.partial(frelu_kernel, H=H, W=W, TC=TC)
    out = pl.pallas_call(
        kernel,
        out_shape=jax.ShapeDtypeStruct((N, C_pad, S_pad), x.dtype),
        grid_spec=pltpu.PrefetchScalarGridSpec(
            num_scalar_prefetch=0,
            grid=grid,
            in_specs=[
                # Whole param table, constant block index -> loaded once, stays
                # resident in VMEM across all grid steps.
                pl.BlockSpec((C_pad, 16), lambda n, c: (0, 0)),
                pl.BlockSpec((pl.Squeezed(), TC, S_pad),
                             lambda n, c: (n, c, 0)),
            ],
            out_specs=pl.BlockSpec((pl.Squeezed(), TC, S_pad),
                                   lambda n, c: (n, c, 0)),
        ),
        compiler_params=pltpu.CompilerParams(
            dimension_semantics=("parallel", "parallel"),
            vmem_limit_bytes=vmem_limit),
        cost_estimate=pl.CostEstimate(
            flops=22 * N * C_pad * S_pad,
            transcendentals=0,
            bytes_accessed=2 * N * C_pad * S_pad * itemsize),
    )(params, x2)
    return out[:, :C, :S].reshape(N, C, H, W)


def frelu_ref(x, w, scale, bias):
    N, C, H, W = x.shape
    conv = jax.lax.conv_general_dilated(
        x, w.reshape(C, 1, 3, 3),
        window_strides=(1, 1), padding=((1, 1), (1, 1)),
        dimension_numbers=("NCHW", "OIHW", "NCHW"),
        feature_group_count=C)
    y = conv * scale.reshape(1, C, 1, 1) + bias.reshape(1, C, 1, 1)
    return jnp.maximum(x, y)


def _make_case(key, N, C, H, W):
    k_x, k_w, k_g, k_b, k_m, k_v = jax.random.split(key, 6)
    x = jax.random.normal(k_x, (N, C, H, W), dtype=jnp.float32)
    w = jax.random.normal(k_w, (C, 3, 3), dtype=jnp.float32) * 0.2
    eps = 1e-5
    gamma = 1.0 + 0.1 * jax.random.normal(k_g, (C,), dtype=jnp.float32)
    beta = 0.1 * jax.random.normal(k_b, (C,), dtype=jnp.float32)
    running_mean = 0.1 * jax.random.normal(k_m, (C,), dtype=jnp.float32)
    running_var = 1.0 + 0.1 * jax.random.uniform(k_v, (C,), dtype=jnp.float32)
    scale = gamma / jnp.sqrt(running_var + eps)
    bias = beta - running_mean * scale
    return x, w, scale, bias


if __name__ == "__main__":
    key = jax.random.PRNGKey(0)
    k1, k2 = jax.random.split(key)

    # Case 1: lane-aligned spatial (16x16 -> S=256).
    x, w, scale, bias = _make_case(k1, 2, 8, 16, 16)
    out = jax.block_until_ready(frelu(x, w, scale, bias))
    ref = jax.block_until_ready(frelu_ref(x, w, scale, bias))
    assert out.shape == x.shape
    assert jnp.allclose(out, ref, atol=1e-5, rtol=1e-5), "mismatch (16x16)"

    # Case 2: exercises the lane pad (7x7 -> S=49 -> 128) and channel pad (4 -> 8).
    x, w, scale, bias = _make_case(k2, 1, 4, 7, 7)
    out = jax.block_until_ready(frelu(x, w, scale, bias))
    ref = jax.block_until_ready(frelu_ref(x, w, scale, bias))
    assert out.shape == x.shape
    assert jnp.allclose(out, ref, atol=1e-5, rtol=1e-5), "mismatch (7x7)"

    print("KERNEL_OK")
</pallas_src>

<mosaic_0001>
module attributes {stable_mosaic.version = 11 : i64} {
  func.func @frelu_kernel(%arg0: i32, %arg1: i32, %arg2: memref<8x16xf32, #tpu.memory_space<vmem>>, %arg3: memref<1x8x256xf32, #tpu.memory_space<vmem>>, %arg4: memref<1x8x256xf32, #tpu.memory_space<vmem>>) attributes {dimension_semantics = [#tpu.dimension_semantics<parallel>, #tpu.dimension_semantics<parallel>], iteration_bounds = array<i64: 2, 1>, scalar_prefetch = 0 : i64, scratch_operands = 0 : i64, tpu.core_type = #tpu.core_type<tc>, window_params = [{pipeline_mode = #tpu.pipeline_mode<synchronous>, transform_indices = @transform_0, window_bounds = array<i64: 8, 16>}, {transform_indices = @transform_1, window_bounds = array<i64: 1, 8, 256>}, {transform_indices = @transform_2, window_bounds = array<i64: 1, 8, 256>}]} {
    %c0 = arith.constant 0 : index
    %c0_0 = arith.constant 0 : index
    %c0_1 = arith.constant 0 : index
    %0 = vector.load %arg3[%c0, %c0_0, %c0_1] : memref<1x8x256xf32, #tpu.memory_space<vmem>>, vector<1x8x256xf32>
    %1 = vector.shape_cast %0 : vector<1x8x256xf32> to vector<8x256xf32>
    %c8_i32 = arith.constant 8 : i32
    %2 = arith.muli %arg1, %c8_i32 : i32
    %3 = tpu.assume_multiple %2, 8 : i32
    %4 = arith.index_cast %3 : i32 to index
    %c0_2 = arith.constant 0 : index
    %5 = vector.load %arg2[%4, %c0_2] : memref<8x16xf32, #tpu.memory_space<vmem>>, vector<8x16xf32>
    %6 = vector.extract_strided_slice %5 {offsets = [0, 0], sizes = [8, 9], strides = [1, 1]} : vector<8x16xf32> to vector<8x9xf32>
    %7 = vector.extract_strided_slice %5 {offsets = [0, 9], sizes = [8, 1], strides = [1, 1]} : vector<8x16xf32> to vector<8x1xf32>
    %8 = tpu.iota {dimensions = array<i32: 1>} : vector<1x256xi32>
    %c16_i32 = arith.constant 16 : i32
    %c0_i32 = arith.constant 0 : i32
    %9 = arith.cmpi eq, %c16_i32, %c0_i32 : i32
    %c1_i32 = arith.constant 1 : i32
    %10 = arith.select %9, %c1_i32, %c16_i32 : i32
    %11 = vector.broadcast %10 : i32 to vector<1x256xi32>
    %12 = arith.remsi %8, %11 : vector<1x256xi32>
    %c0_i32_3 = arith.constant 0 : i32
    %13 = vector.broadcast %c0_i32_3 : i32 to vector<1x256xi32>
    %14 = arith.cmpi ne, %12, %13 : vector<1x256xi32>
    %c0_i32_4 = arith.constant 0 : i32
    %15 = vector.broadcast %c0_i32_4 : i32 to vector<1x256xi32>
    %16 = arith.cmpi slt, %12, %15 : vector<1x256xi32>
    %c0_i32_5 = arith.constant 0 : i32
    %17 = arith.cmpi slt, %10, %c0_i32_5 : i32
    %18 = vector.broadcast %17 : i1 to vector<1x256xi1>
    %19 = vector.broadcast %18 : vector<1x256xi1> to vector<1x256xi1>
    %20 = arith.xori %16, %19 : vector<1x256xi1>
    %21 = arith.andi %20, %14 : vector<1x256xi1>
    %22 = vector.broadcast %10 : i32 to vector<1x256xi32>
    %23 = arith.addi %12, %22 : vector<1x256xi32>
    %24 = arith.select %21, %23, %12 : vector<1x256xi1>, vector<1x256xi32>
    %c15_i32 = arith.constant 15 : i32
    %25 = vector.broadcast %c15_i32 : i32 to vector<1x256xi32>
    %26 = arith.cmpi eq, %24, %25 : vector<1x256xi32>
    %cst = arith.constant 0.000000e+00 : f32
    %27 = vector.shape_cast %26 : vector<1x256xi1> to vector<1x256xi1>
    %28 = vector.broadcast %27 : vector<1x256xi1> to vector<8x256xi1>
    %29 = vector.broadcast %cst : f32 to vector<8x256xf32>
    %30 = arith.select %28, %29, %1 : vector<8x256xi1>, vector<8x256xf32>
    %c0_i32_6 = arith.constant 0 : i32
    %31 = vector.broadcast %c0_i32_6 : i32 to vector<1x256xi32>
    %32 = arith.cmpi eq, %24, %31 : vector<1x256xi32>
    %cst_7 = arith.constant 0.000000e+00 : f32
    %33 = vector.shape_cast %32 : vector<1x256xi1> to vector<1x256xi1>
    %34 = vector.broadcast %33 : vector<1x256xi1> to vector<8x256xi1>
    %35 = vector.broadcast %cst_7 : f32 to vector<8x256xf32>
    %36 = arith.select %34, %35, %1 : vector<8x256xi1>, vector<8x256xf32>
    %c1_i32_8 = arith.constant 1 : i32
    %37 = tpu.dynamic_rotate %30 by %c1_i32_8 dim 1 : vector<8x256xf32>, i32 -> vector<8x256xf32>
    %38 = vector.extract_strided_slice %6 {offsets = [0, 3], sizes = [8, 1], strides = [1, 1]} : vector<8x9xf32> to vector<8x1xf32>
    %39 = vector.broadcast %38 : vector<8x1xf32> to vector<8x256xf32>
    %40 = arith.mulf %39, %37 : vector<8x256xf32>
    %41 = vector.extract_strided_slice %6 {offsets = [0, 4], sizes = [8, 1], strides = [1, 1]} : vector<8x9xf32> to vector<8x1xf32>
    %42 = vector.broadcast %41 : vector<8x1xf32> to vector<8x256xf32>
    %43 = arith.mulf %42, %1 : vector<8x256xf32>
    %44 = arith.addf %40, %43 : vector<8x256xf32>
    %c255_i32 = arith.constant 255 : i32
    %45 = tpu.dynamic_rotate %36 by %c255_i32 dim 1 : vector<8x256xf32>, i32 -> vector<8x256xf32>
    %46 = vector.extract_strided_slice %6 {offsets = [0, 5], sizes = [8, 1], strides = [1, 1]} : vector<8x9xf32> to vector<8x1xf32>
    %47 = vector.broadcast %46 : vector<8x1xf32> to vector<8x256xf32>
    %48 = arith.mulf %47, %45 : vector<8x256xf32>
    %49 = arith.addf %44, %48 : vector<8x256xf32>
    %50 = vector.broadcast %7 : vector<8x1xf32> to vector<8x256xf32>
    %51 = arith.addf %49, %50 : vector<8x256xf32>
    %c16_i32_9 = arith.constant 16 : i32
    %52 = vector.broadcast %c16_i32_9 : i32 to vector<1x256xi32>
    %53 = arith.cmpi sge, %8, %52 : vector<1x256xi32>
    %c17_i32 = arith.constant 17 : i32
    %54 = tpu.dynamic_rotate %30 by %c17_i32 dim 1 : vector<8x256xf32>, i32 -> vector<8x256xf32>
    %55 = vector.extract_strided_slice %6 {offsets = [0, 0], sizes = [8, 1], strides = [1, 1]} : vector<8x9xf32> to vector<8x1xf32>
    %56 = vector.broadcast %55 : vector<8x1xf32> to vector<8x256xf32>
    %57 = arith.mulf %56, %54 : vector<8x256xf32>
    %c16_i32_10 = arith.constant 16 : i32
    %58 = tpu.dynamic_rotate %1 by %c16_i32_10 dim 1 : vector<8x256xf32>, i32 -> vector<8x256xf32>
    %59 = vector.extract_strided_slice %6 {offsets = [0, 1], sizes = [8, 1], strides = [1, 1]} : vector<8x9xf32> to vector<8x1xf32>
    %60 = vector.broadcast %59 : vector<8x1xf32> to vector<8x256xf32>
    %61 = arith.mulf %60, %58 : vector<8x256xf32>
    %62 = arith.addf %57, %61 : vector<8x256xf32>
    %c15_i32_11 = arith.constant 15 : i32
    %63 = tpu.dynamic_rotate %36 by %c15_i32_11 dim 1 : vector<8x256xf32>, i32 -> vector<8x256xf32>
    %64 = vector.extract_strided_slice %6 {offsets = [0, 2], sizes = [8, 1], strides = [1, 1]} : vector<8x9xf32> to vector<8x1xf32>
    %65 = vector.broadcast %64 : vector<8x1xf32> to vector<8x256xf32>
    %66 = arith.mulf %65, %63 : vector<8x256xf32>
    %67 = arith.addf %62, %66 : vector<8x256xf32>
    %cst_12 = arith.constant 0.000000e+00 : f32
    %68 = vector.shape_cast %53 : vector<1x256xi1> to vector<1x256xi1>
    %69 = vector.broadcast %68 : vector<1x256xi1> to vector<8x256xi1>
    %70 = vector.broadcast %cst_12 : f32 to vector<8x256xf32>
    %71 = arith.select %69, %67, %70 : vector<8x256xi1>, vector<8x256xf32>
    %72 = arith.addf %51, %71 : vector<8x256xf32>
    %c240_i32 = arith.constant 240 : i32
    %73 = vector.broadcast %c240_i32 : i32 to vector<1x256xi32>
    %74 = arith.cmpi slt, %8, %73 : vector<1x256xi32>
    %c241_i32 = arith.constant 241 : i32
    %75 = tpu.dynamic_rotate %30 by %c241_i32 dim 1 : vector<8x256xf32>, i32 -> vector<8x256xf32>
    %76 = vector.extract_strided_slice %6 {offsets = [0, 6], sizes = [8, 1], strides = [1, 1]} : vector<8x9xf32> to vector<8x1xf32>
    %77 = vector.broadcast %76 : vector<8x1xf32> to vector<8x256xf32>
    %78 = arith.mulf %77, %75 : vector<8x256xf32>
    %c240_i32_13 = arith.constant 240 : i32
    %79 = tpu.dynamic_rotate %1 by %c240_i32_13 dim 1 : vector<8x256xf32>, i32 -> vector<8x256xf32>
    %80 = vector.extract_strided_slice %6 {offsets = [0, 7], sizes = [8, 1], strides = [1, 1]} : vector<8x9xf32> to vector<8x1xf32>
    %81 = vector.broadcast %80 : vector<8x1xf32> to vector<8x256xf32>
    %82 = arith.mulf %81, %79 : vector<8x256xf32>
    %83 = arith.addf %78, %82 : vector<8x256xf32>
    %c239_i32 = arith.constant 239 : i32
    %84 = tpu.dynamic_rotate %36 by %c239_i32 dim 1 : vector<8x256xf32>, i32 -> vector<8x256xf32>
    %85 = vector.extract_strided_slice %6 {offsets = [0, 8], sizes = [8, 1], strides = [1, 1]} : vector<8x9xf32> to vector<8x1xf32>
    %86 = vector.broadcast %85 : vector<8x1xf32> to vector<8x256xf32>
    %87 = arith.mulf %86, %84 : vector<8x256xf32>
    %88 = arith.addf %83, %87 : vector<8x256xf32>
    %cst_14 = arith.constant 0.000000e+00 : f32
    %89 = vector.shape_cast %74 : vector<1x256xi1> to vector<1x256xi1>
    %90 = vector.broadcast %89 : vector<1x256xi1> to vector<8x256xi1>
    %91 = vector.broadcast %cst_14 : f32 to vector<8x256xf32>
    %92 = arith.select %90, %88, %91 : vector<8x256xi1>, vector<8x256xf32>
    %93 = arith.addf %72, %92 : vector<8x256xf32>
    %94 = arith.maximumf %1, %93 : vector<8x256xf32>
    %c0_15 = arith.constant 0 : index
    %c0_16 = arith.constant 0 : index
    %c0_17 = arith.constant 0 : index
    %95 = vector.load %arg4[%c0_15, %c0_16, %c0_17] : memref<1x8x256xf32, #tpu.memory_space<vmem>>, vector<1x8x256xf32>
    %96 = vector.shape_cast %95 : vector<1x8x256xf32> to vector<8x256xf32>
    %97 = vector.shape_cast %94 : vector<8x256xf32> to vector<1x8x256xf32>
    tpu.vector_store %arg4[%c0_15, %c0_16, %c0_17], %97 {strides = array<i32>} : memref<1x8x256xf32, #tpu.memory_space<vmem>>, vector<1x8x256xf32>,
    return
  }
  func.func @transform_0(%arg0: i32, %arg1: i32) -> (i32, i32) {
    %c0_i32 = arith.constant 0 : i32
    %c0_i32_0 = arith.constant 0 : i32
    %c0_i32_1 = arith.constant 0 : i32
    return %c0_i32, %c0_i32_0 : i32, i32
  }
  func.func @transform_1(%arg0: i32, %arg1: i32) -> (i32, i32, i32) {
    %c0_i32 = arith.constant 0 : i32
    %c0_i32_0 = arith.constant 0 : i32
    return %arg0, %arg1, %c0_i32 : i32, i32, i32
  }
  func.func @transform_2(%arg0: i32, %arg1: i32) -> (i32, i32, i32) {
    %c0_i32 = arith.constant 0 : i32
    %c0_i32_0 = arith.constant 0 : i32
    return %arg0, %arg1, %c0_i32 : i32, i32, i32
  }
}

</mosaic_0001>

<llo_original>
// kernel: tpu_custom_call.1
$region0: #{tpu_custom_call.1}
  #allocation0 [shape = 'u32[]', space=smem, size = 0x4, offset = 0x4, fixed_abs, tag = 'smem constant byte address 0x4 - core index']
  #allocation1 [shape = 'u32[144,128]{1,0:T(1,128)}', space=vmem, size = 0x12000, scoped, tag = 'internal scratch']
  %s0 = inlined_call_operand.hbm [shape: f32[8,16], index: 0, kind: input, shape index: {}]
  %s1 = inlined_call_operand.hbm [shape: f32[2,8,256], index: 1, kind: input, shape index: {}]
  %s2 = inlined_call_operand.hbm [shape: f32[2,8,256], index: 2, kind: output, shape index: {}]
  %s3 = sld [smem:[#allocation0]]
  $region49: #{tpu_custom_call.1} parent=0
    _
  %s5 = ssub.s32 1, %s3
  %s6 = scalar_select 0, %s5, %s3
  $region1: #{tpu_custom_call.1} parent=0
    #allocation2 [shape = 'u8[4096]{0}', space=vmem, size = 0x1000, scoped, tag = 'input window, operand 0, single buffered']
    #allocation3 [shape = 's32[2]{0}', space=sflag, size = 0x8, scoped, tag = 'scoped memory for tpu_custom_call.1']
    #allocation4 [shape = 's32[2]{0}', space=sflag, size = 0x8, scoped, tag = 'scoped memory for tpu_custom_call.1']
    #allocation5 [shape = 'u8[16384]{0}', space=vmem, size = 0x4000, scoped, tag = 'input window, operand 1']
    #allocation6 [shape = 's32[2]{0}', space=sflag, size = 0x8, scoped, tag = 'scoped memory for tpu_custom_call.1']
    #allocation7 [shape = 'u8[16384]{0}', space=vmem, size = 0x4000, scoped, tag = 'output window, operand 0']
    %7 = vsyncpa [#allocation3], 0
    %8 = vsyncpa [#allocation6], 0
    %s9 = scalar_lea.sflag [#allocation6], 1
    %10 = vsyncpa %s9, 0
    %11 = vsyncpa [#allocation4], 0
    %s12 = scalar_lea.sflag [#allocation4], 1
    %13 = vsyncpa %s12, 0
    loop: start=0, step=1, limit=4
    $region2: #{tpu_custom_call.1} parent=1 // loop_pre_header
      _
    $region3: #{tpu_custom_call.1} parent=1 // loop_header
      %s15 = sphi 0, %s19
      %p16 = scmp.ge.s32.totalorder %s15, 4
      %s22 = sphi 0, %s34
      %s23 = sphi 0, %s30
      %s24 = sphi 0, %s22
      %s25 = sphi 0, %s23
      %s26 = sphi 0, %s24
      %s27 = sphi 0, %s25
      %s35 = sphi 0, %s35
      %s37 = sphi 0, %s35
      %s38 = sphi 0, %s37
      %s52 = sphi 0, %s38
      %s60 = sphi 0, %s62
      %s63 = sphi 0, %s60
      %s64 = sphi 0, %s63
      %s80 = sphi 0, %s64
      %s88 = sphi 0, %s90
      %s91 = sphi 0, %s88
      %s92 = sphi 0, %s91
      %s108 = sphi 0, %s92
    $region4: #{tpu_custom_call.1} parent=1 // loop_header_branch
      %18 = sbr.rel (%p16) target = $region8
    $region5: #{tpu_custom_call.1} parent=1 // loop_body
      %s20 = ssub.s32 %s15, 1
      %s21 = ssub.s32 %s15, 2
      %s28 = sadd.s32 1, %s23
      %p29 = scmp.ge.s32.totalorder %s28, 1
      %s30 = scalar_select %p29, 0, %s28
      %s31 = sadd.s32 1, %s22
      %s32 = scalar_select %p29, %s31, %s22
      %p33 = scmp.ge.s32.totalorder %s32, 2
      %s34 = scalar_select %p33, 0, %s32
      %s36 = sadd.s32 %s35, 1
      %p39 = scmp.eq.s32.totalorder %s15, 1
      %p40 = scmp.ne.s32.totalorder %s35, %s37
      %p41 = scmp.eq.s32.totalorder %s15, 0
      %p42 = por %p40, %p41
      %p43 = scmp.ne.s32.totalorder %s35, %s37
      %p44 = scmp.eq.s32.totalorder %s20, 1
      %p45 = por %p43, %p44
      %p46 = scmp.ne.s32.totalorder %s37, %s38
      %p47 = scmp.eq.s32.totalorder %s20, 0
      %p48 = por %p46, %p47
      %p49 = scmp.ne.s32.totalorder %s37, %s38
      %p50 = scmp.eq.s32.totalorder %s21, 1
      %p51 = por %p49, %p50
      %p53 = scmp.ne.s32.totalorder %s38, %s52
      %p54 = scmp.eq.s32.totalorder %s21, 0
      %p55 = por %p53, %p54
      %s56 = ssub.s32 %s22, %s34
      %s57 = ssub.s32 %s23, %s30
      %s58 = sor.u32 %s56, %s57
      %p59 = scmp.eq.s32.totalorder %s58, 0
      %s61 = sadd.s32 %s60, 1
      %s62 = scalar_select %p59, %s60, %s61
      %p65 = pneg %p59
      %p66 = scmp.eq.s32.totalorder %s15, 1
      %p67 = por %p65, %p66
      %p68 = scmp.ne.s32.totalorder %s60, %s63
      %p69 = scmp.eq.s32.totalorder %s15, 0
      %p70 = por %p68, %p69
      %p71 = scmp.ne.s32.totalorder %s60, %s63
      %p72 = scmp.eq.s32.totalorder %s20, 1
      %p73 = por %p71, %p72
      %p74 = scmp.ne.s32.totalorder %s63, %s64
      %p75 = scmp.eq.s32.totalorder %s20, 0
      %p76 = por %p74, %p75
      %p77 = scmp.ne.s32.totalorder %s63, %s64
      %p78 = scmp.eq.s32.totalorder %s21, 1
      %p79 = por %p77, %p78
      %p81 = scmp.ne.s32.totalorder %s64, %s80
      %p82 = scmp.eq.s32.totalorder %s21, 0
      %p83 = por %p81, %p82
      %s84 = ssub.s32 %s22, %s34
      %s85 = ssub.s32 %s23, %s30
      %s86 = sor.u32 %s84, %s85
      %p87 = scmp.eq.s32.totalorder %s86, 0
      %s89 = sadd.s32 %s88, 1
      %s90 = scalar_select %p87, %s88, %s89
      %p93 = pneg %p87
      %p94 = scmp.eq.s32.totalorder %s15, 1
      %p95 = por %p93, %p94
      %p96 = scmp.ne.s32.totalorder %s88, %s91
      %p97 = scmp.eq.s32.totalorder %s15, 0
      %p98 = por %p96, %p97
      %p99 = scmp.ne.s32.totalorder %s88, %s91
      %p100 = scmp.eq.s32.totalorder %s20, 1
      %p101 = por %p99, %p100
      %p102 = scmp.ne.s32.totalorder %s91, %s92
      %p103 = scmp.eq.s32.totalorder %s20, 0
      %p104 = por %p102, %p103
      %p105 = scmp.ne.s32.totalorder %s91, %s92
      %p106 = scmp.eq.s32.totalorder %s21, 1
      %p107 = por %p105, %p106
      %p109 = scmp.ne.s32.totalorder %s92, %s108
      %p110 = scmp.eq.s32.totalorder %s21, 0
      %p111 = por %p109, %p110
      %p112 = scmp.le.s32.totalorder 1, %s15
      %p113 = scmp.lt.s32.totalorder %s15, 3
      %p114 = pnand %p112, %p113
      %p115 = pneg %p114
      // Predicated region
      $region9: #{tpu_custom_call.1} parent=5 // pred_check
        _
      $region10: #{tpu_custom_call.1} parent=5 // pred_check_branch
        %117 = sbr.rel (%p114) target = $region12
      $region11: #{tpu_custom_call.1} parent=5 // pred_region
        %s118 = ssub.s32 %s15, 1
        // Predicated region
        $region13: #{tpu_custom_call.1} parent=11 // pred_check
          %p119 = pneg %p48
        $region14: #{tpu_custom_call.1} parent=11 // pred_check_branch
          %121 = sbr.rel (%p119) target = $region16
        $region15: #{tpu_custom_call.1} parent=11 // pred_region
          %s123 = ssub.s32 128, 128
          %124 = vsyncadd [#allocation3], %s123
          %s126 = sshll.u32 [#allocation2], 4
          %s127 = int_to_ptr.vmem [resolvable:$true] %s126
          %129 = dma.hbm_to_vmem [thread:$0]  %s0, 128, %s127, [#allocation3]
        $region16: #{tpu_custom_call.1} parent=11 // pred_fallthru
          _
      $region12: #{tpu_custom_call.1} parent=5 // pred_fallthru
        _
      %p130 = scmp.lt.s32.totalorder %s15, 2
      // Predicated region
      $region17: #{tpu_custom_call.1} parent=5 // pred_check
        %p131 = pneg %p130
      $region18: #{tpu_custom_call.1} parent=5 // pred_check_branch
        %133 = sbr.rel (%p131) target = $region20
      $region19: #{tpu_custom_call.1} parent=5 // pred_region
        // Predicated region
        $region21: #{tpu_custom_call.1} parent=19 // pred_check
          %p134 = pneg %p70
        $region22: #{tpu_custom_call.1} parent=19 // pred_check_branch
          %136 = sbr.rel (%p134) target = $region24
        $region23: #{tpu_custom_call.1} parent=19 // pred_region
          %s137 = sand.u32 %s60, 1
          %s138 = scalar_lea.sflag [#allocation6], %s137
          %s139 = sand.u32 %s60, 1
          %s140 = smul.addr %s139, 16
          %s141 = scalar_lea.vmem [#allocation5], %s140
          %s143 = ssub.s32 256, 256
          %144 = vsyncadd %s138, %s143
          %s145 = smul.addr %s23, 2
          %s146 = smul.addr %s22, 2
          %s147 = sadd.s32 %s145, %s146
          %s148 = smul.addr %s147, 128
          %s149 = scalar_lea.hbm %s1, %s148
          %s151 = sshll.u32 %s141, 4
          %s152 = int_to_ptr.vmem [resolvable:$true] %s151
          %154 = dma.hbm_to_vmem [thread:$0]  %s149, 256, %s152, %s138
        $region24: #{tpu_custom_call.1} parent=19 // pred_fallthru
          _
      $region20: #{tpu_custom_call.1} parent=5 // pred_fallthru
        _
      %p155 = scmp.le.s32.totalorder 1, %s15
      %p156 = scmp.lt.s32.totalorder %s15, 3
      %p157 = pnand %p155, %p156
      %p158 = pneg %p157
      // Predicated region
      $region25: #{tpu_custom_call.1} parent=5 // pred_check
        _
      $region26: #{tpu_custom_call.1} parent=5 // pred_check_branch
        %160 = sbr.rel (%p157) target = $region28
      $region27: #{tpu_custom_call.1} parent=5 // pred_region
        %s161 = ssub.s32 %s15, 1
        // Predicated region
        $region29: #{tpu_custom_call.1} parent=27 // pred_check
          %p162 = pneg %p48
        $region30: #{tpu_custom_call.1} parent=27 // pred_check_branch
          %164 = sbr.rel (%p162) target = $region32
        $region31: #{tpu_custom_call.1} parent=27 // pred_region
          %165 = dma.done [#allocation3], 128
        $region32: #{tpu_custom_call.1} parent=27 // pred_fallthru
          _
        %s166 = sand.u32 %s63, 1
        %s167 = scalar_lea.sflag [#allocation6], %s166
        %s168 = sand.u32 %s63, 1
        %s169 = smul.addr %s168, 16
        %s170 = scalar_lea.vmem [#allocation5], %s169
        // Predicated region
        $region33: #{tpu_custom_call.1} parent=27 // pred_check
          %p171 = pneg %p76
        $region34: #{tpu_custom_call.1} parent=27 // pred_check_branch
          %173 = sbr.rel (%p171) target = $region36
        $region35: #{tpu_custom_call.1} parent=27 // pred_region
          %174 = dma.done %s167, 256
        $region36: #{tpu_custom_call.1} parent=27 // pred_fallthru
          _
        %p175 = pneg %p48
        %p176 = pneg %p45
        %s177 = sand.u32 %s63, 1
        %s178 = scalar_lea.sflag [#allocation6], %s177
        %s179 = sand.u32 %s63, 1
        %s180 = smul.addr %s179, 16
        %s181 = scalar_lea.vmem [#allocation5], %s180
        %p182 = pneg %p76
        %p183 = pneg %p73
        %p184 = pneg %p104
        %p185 = pneg %p101
        %s186 = sand.u32 %s91, 1
        %s187 = scalar_lea.sflag [#allocation4], %s186
        %s188 = sand.u32 %s91, 1
        %s189 = smul.addr %s188, 16
        %s190 = scalar_lea.vmem [#allocation7], %s189
        %v191 = vld [vmem:[%s170] sm:$0xff]
        %v192 = vld [vmem:[%s170 + $0x8] sm:$0xff]
        %s193 = smul.u32 %s25, 8
        %s194 = scalar_lea.vmem [#allocation2], %s193
        %v195 = vld [vmem:[%s194] sm:$0xff]
        %v196 = vlaneseq
        %v197 = vand.u32 %v196, 127
        %v198 = vadd.s32 %v197, 128
        %vm199 = vcmp.lt.s32.totalorder %v197, 0
        %v200 = vsub.s32 0, %v197
        %v201 = vsel %vm199, %v200, %v197
        %v202 = vshrl.u32 %v201, 4
        %v203 = vand.u32 %v201, 15
        %v204 = vsub.s32 0, %v203
        %v205 = vsel %vm199, %v204, %v203
        %vm206 = vcmp.lt.s32.totalorder %v198, 0
        %v207 = vsub.s32 0, %v198
        %v208 = vsel %vm206, %v207, %v198
        %v209 = vshrl.u32 %v208, 4
        %v210 = vand.u32 %v208, 15
        %v211 = vsub.s32 0, %v210
        %v212 = vsel %vm206, %v211, %v210
        %vm213 = vcmp.ne.s32.totalorder %v205, 0
        %vm214 = vcmp.ne.s32.totalorder %v212, 0
        %vm215 = vcmp.lt.s32.totalorder %v205, 0
        %vm216 = vcmp.lt.s32.totalorder %v212, 0
        %vm217 = vmand %vm215, %vm213
        %vm218 = vmand %vm216, %vm214
        %v219 = vadd.s32 %v205, 16
        %v220 = vadd.s32 %v212, 16
        %v221 = vsel %vm217, %v219, %v205
        %v222 = vsel %vm218, %v220, %v212
        %vm223 = vcmp.eq.s32.totalorder %v221, 15
        %vm224 = vcmp.eq.s32.totalorder %v222, 15
        %v225 = vsel %vm223, 1, 0
        %v226 = vsel %vm224, 1, 0
        %vm227 = vcmp.eq.s32.totalorder %v225, 1
        %vm228 = vcmp.eq.s32.totalorder %v226, 1
        %v229 = vsel %vm227, 0.0, %v191
        %v230 = vsel %vm228, 0.0, %v192
        %vm231 = vcmp.eq.s32.totalorder %v221, 0
        %vm232 = vcmp.eq.s32.totalorder %v222, 0
        %v233 = vsel %vm231, 1, 0
        %v234 = vsel %vm232, 1, 0
        %vm235 = vcmp.eq.s32.totalorder %v233, 1
        %vm236 = vcmp.eq.s32.totalorder %v234, 1
        %v237 = vsel %vm235, 0.0, %v191
        %v238 = vsel %vm236, 0.0, %v192
        %239 = vrot.lane.b32.xlu0 %v229, 1
        %v240 = vpop.permute.xlu0 %239
        %241 = vrot.lane.b32.xlu0 %v230, 1
        %v242 = vpop.permute.xlu0 %241
        %vm243 = vcmp.lt.s32.totalorder %v197, 1
        %v244 = vsel %vm243, %v240, %v242
        %v245 = vsel %vm243, %v242, %v240
        %247 = vset.pattern.permute.xlu0 3
        %248 = vperm.xlu0 %247, %v195
        %v249 = vpop.permute.xlu0 %248
        %v251 = vmul.f32 %v249, %v245
        %v252 = vmul.f32 %v249, %v244
        %253 = vset.pattern.permute.xlu0 4
        %254 = vperm.xlu0 %253, %v195
        %v255 = vpop.permute.xlu0 %254
        %v257 = vmul.f32 %v255, %v191
        %v258 = vmul.f32 %v255, %v192
        %v259 = vadd.f32 %v251, %v257
        %v260 = vadd.f32 %v252, %v258
        %261 = vrot.lane.b32.xlu0 %v237, 127
        %v262 = vpop.permute.xlu0 %261
        %263 = vrot.lane.b32.xlu0 %v238, 127
        %v264 = vpop.permute.xlu0 %263
        %vm265 = vcmp.lt.s32.totalorder %v197, 127
        %v266 = vsel %vm265, %v262, %v264
        %v267 = vsel %vm265, %v264, %v262
        %268 = vset.pattern.permute.xlu0 5
        %269 = vperm.xlu0 %268, %v195
        %v270 = vpop.permute.xlu0 %269
        %v272 = vmul.f32 %v270, %v266
        %v273 = vmul.f32 %v270, %v267
        %v274 = vadd.f32 %v259, %v272
        %v275 = vadd.f32 %v260, %v273
        %276 = vset.pattern.permute.xlu0 9
        %277 = vperm.xlu0 %276, %v195
        %v278 = vpop.permute.xlu0 %277
        %v280 = vadd.f32 %v274, %v278
        %v281 = vadd.f32 %v275, %v278
        %vm282 = vcmp.ge.s32.totalorder %v197, 16
        %vm283 = vcmp.ge.s32.totalorder %v198, 16
        %284 = vrot.lane.b32.xlu0 %v229, 17
        %v285 = vpop.permute.xlu0 %284
        %286 = vrot.lane.b32.xlu0 %v230, 17
        %v287 = vpop.permute.xlu0 %286
        %vm288 = vcmp.lt.s32.totalorder %v197, 17
        %v289 = vsel %vm288, %v285, %v287
        %v290 = vsel %vm288, %v287, %v285
        %291 = vset.pattern.permute.xlu0 0
        %292 = vperm.xlu0 %291, %v195
        %v293 = vpop.permute.xlu0 %292
        %v295 = vmul.f32 %v293, %v290
        %v296 = vmul.f32 %v293, %v289
        %297 = vrot.lane.b32.xlu0 %v191, 16
        %v298 = vpop.permute.xlu0 %297
        %299 = vrot.lane.b32.xlu0 %v192, 16
        %v300 = vpop.permute.xlu0 %299
        %vm301 = vcmp.lt.s32.totalorder %v197, 16
        %v302 = vsel %vm301, %v298, %v300
        %v303 = vsel %vm301, %v300, %v298
        %304 = vset.pattern.permute.xlu0 1
        %305 = vperm.xlu0 %304, %v195
        %v306 = vpop.permute.xlu0 %305
        %v308 = vmul.f32 %v306, %v303
        %v309 = vmul.f32 %v306, %v302
        %v310 = vadd.f32 %v295, %v308
        %v311 = vadd.f32 %v296, %v309
        %312 = vrot.lane.b32.xlu0 %v237, 15
        %v313 = vpop.permute.xlu0 %312
        %314 = vrot.lane.b32.xlu0 %v238, 15
        %v315 = vpop.permute.xlu0 %314
        %vm316 = vcmp.lt.s32.totalorder %v197, 15
        %v317 = vsel %vm316, %v313, %v315
        %v318 = vsel %vm316, %v315, %v313
        %319 = vset.pattern.permute.xlu0 2
        %320 = vperm.xlu0 %319, %v195
        %v321 = vpop.permute.xlu0 %320
        %v323 = vmul.f32 %v321, %v318
        %v324 = vmul.f32 %v321, %v317
        %v325 = vadd.f32 %v310, %v323
        %v326 = vadd.f32 %v311, %v324
        %v327 = vsel %vm282, 1, 0
        %v328 = vsel %vm283, 1, 0
        %vm329 = vcmp.eq.s32.totalorder %v327, 1
        %vm330 = vcmp.eq.s32.totalorder %v328, 1
        %v331 = vsel %vm329, %v325, 0.0
        %v332 = vsel %vm330, %v326, 0.0
        %v333 = vadd.f32 %v280, %v331
        %v334 = vadd.f32 %v281, %v332
        %vm335 = vcmp.lt.s32.totalorder %v197, 240
        %vm336 = vcmp.lt.s32.totalorder %v198, 240
        %337 = vrot.lane.b32.xlu0 %v229, 113
        %v338 = vpop.permute.xlu0 %337
        %339 = vrot.lane.b32.xlu0 %v230, 113
        %v340 = vpop.permute.xlu0 %339
        %vm341 = vcmp.lt.s32.totalorder %v197, 113
        %v342 = vsel %vm341, %v338, %v340
        %v343 = vsel %vm341, %v340, %v338
        %344 = vset.pattern.permute.xlu0 6
        %345 = vperm.xlu0 %344, %v195
        %v346 = vpop.permute.xlu0 %345
        %v348 = vmul.f32 %v346, %v342
        %v349 = vmul.f32 %v346, %v343
        %350 = vrot.lane.b32.xlu0 %v191, 112
        %v351 = vpop.permute.xlu0 %350
        %352 = vrot.lane.b32.xlu0 %v192, 112
        %v353 = vpop.permute.xlu0 %352
        %vm354 = vcmp.lt.s32.totalorder %v197, 112
        %v355 = vsel %vm354, %v351, %v353
        %v356 = vsel %vm354, %v353, %v351
        %357 = vset.pattern.permute.xlu0 7
        %358 = vperm.xlu0 %357, %v195
        %v359 = vpop.permute.xlu0 %358
        %v361 = vmul.f32 %v359, %v355
        %v362 = vmul.f32 %v359, %v356
        %v363 = vadd.f32 %v348, %v361
        %v364 = vadd.f32 %v349, %v362
        %365 = vrot.lane.b32.xlu0 %v237, 111
        %v366 = vpop.permute.xlu0 %365
        %367 = vrot.lane.b32.xlu0 %v238, 111
        %v368 = vpop.permute.xlu0 %367
        %vm369 = vcmp.lt.s32.totalorder %v197, 111
        %v370 = vsel %vm369, %v366, %v368
        %v371 = vsel %vm369, %v368, %v366
        %372 = vset.pattern.permute.xlu0 8
        %373 = vperm.xlu0 %372, %v195
        %v374 = vpop.permute.xlu0 %373
        %v376 = vmul.f32 %v374, %v370
        %v377 = vmul.f32 %v374, %v371
        %v378 = vadd.f32 %v363, %v376
        %v379 = vadd.f32 %v364, %v377
        %v380 = vsel %vm335, 1, 0
        %v381 = vsel %vm336, 1, 0
        %vm382 = vcmp.eq.s32.totalorder %v380, 1
        %vm383 = vcmp.eq.s32.totalorder %v381, 1
        %v384 = vsel %vm382, %v378, 0.0
        %v385 = vsel %vm383, %v379, 0.0
        %v386 = vadd.f32 %v333, %v384
        %v387 = vadd.f32 %v334, %v385
        %v388 = vmax.f32 %v191, %v386
        %v389 = vmax.f32 %v192, %v387
        %390 = vst [vmem:[%s190] sm:$0xff] %v388
        %391 = vst [vmem:[%s190 + $0x8] sm:$0xff] %v389
        %s392 = sand.u32 %s91, 1
        %s393 = scalar_lea.sflag [#allocation4], %s392
        %s394 = sand.u32 %s91, 1
        %s395 = smul.addr %s394, 16
        %s396 = scalar_lea.vmem [#allocation7], %s395
        // Predicated region
        $region37: #{tpu_custom_call.1} parent=27 // pred_check
          %p397 = pneg %p101
        $region38: #{tpu_custom_call.1} parent=27 // pred_check_branch
          %399 = sbr.rel (%p397) target = $region40
        $region39: #{tpu_custom_call.1} parent=27 // pred_region
          %s401 = ssub.s32 256, 256
          %402 = vsyncadd %s393, %s401
          %s403 = smul.addr %s25, 2
          %s404 = smul.addr %s24, 2
          %s405 = sadd.s32 %s403, %s404
          %s406 = smul.addr %s405, 128
          %s407 = scalar_lea.hbm %s2, %s406
          %s409 = sshll.u32 %s396, 4
          %s410 = int_to_ptr.vmem [resolvable:$true] %s409
          %412 = dma.vmem_to_hbm [thread:$0]  %s410, 256, %s407, %s393
        $region40: #{tpu_custom_call.1} parent=27 // pred_fallthru
          _
      $region28: #{tpu_custom_call.1} parent=5 // pred_fallthru
        _
      %p413 = scmp.le.s32.totalorder 2, %s15
      // Predicated region
      $region41: #{tpu_custom_call.1} parent=5 // pred_check
        %p414 = pneg %p413
      $region42: #{tpu_custom_call.1} parent=5 // pred_check_branch
        %416 = sbr.rel (%p414) target = $region44
      $region43: #{tpu_custom_call.1} parent=5 // pred_region
        %s417 = ssub.s32 %s15, 2
        // Predicated region
        $region45: #{tpu_custom_call.1} parent=43 // pred_check
          %p418 = pneg %p107
        $region46: #{tpu_custom_call.1} parent=43 // pred_check_branch
          %420 = sbr.rel (%p418) target = $region48
        $region47: #{tpu_custom_call.1} parent=43 // pred_region
          %s421 = sand.u32 %s92, 1
          %s422 = scalar_lea.sflag [#allocation4], %s421
          %s423 = sand.u32 %s92, 1
          %s424 = smul.addr %s423, 16
          %s425 = scalar_lea.vmem [#allocation7], %s424
          %426 = dma.done %s422, 256
        $region48: #{tpu_custom_call.1} parent=43 // pred_fallthru
          _
      $region44: #{tpu_custom_call.1} parent=5 // pred_fallthru
        _
    $region6: #{tpu_custom_call.1} parent=1 // loop_footer
      %s19 = sadd.s32 1, %s15
    $region7: #{tpu_custom_call.1} parent=1 // loop_footer_branch
      %14 = sbr.rel target = $region3
    $region8: #{tpu_custom_call.1} parent=1 // loop_exit
      _
    %427 = vsyncpa [#allocation3], 1
    %s428 = scalar_lea.sflag [#allocation3], 1
    %429 = vsyncpa %s428, 1
    %430 = vsyncpa [#allocation6], 1
    %s431 = scalar_lea.sflag [#allocation6], 1
    %432 = vsyncpa %s431, 1
    %433 = vsyncpa [#allocation4], 1
    %s434 = scalar_lea.sflag [#allocation4], 1
    %435 = vsyncpa %s434, 1

</llo_original>
